<compile_context>
chip_gen: v5e
topology: v5e:2x2
jax: 0.10.0
libtpu: 0.0.40
codegen_flags: <defaults>
</compile_context>

<pallas_src>
import math
from functools import partial

import jax
import jax.numpy as jnp
from jax.experimental import pallas as pl
from jax.experimental.pallas import tpu as pltpu


# ----------------------------------------------------------------------------
# small helpers
# ----------------------------------------------------------------------------
def _round_up(x, m):
    return ((x + m - 1) // m) * m


def _pad_rows(a, mp):
    m = a.shape[0]
    if m == mp:
        return a
    return jnp.pad(a, ((0, mp - m), (0, 0)))


def _small_mxu_device():
    """128x128-MXU generations (v2-v5): K=128 pieces already fill the MXU."""
    try:
        kind = jax.devices()[0].device_kind.lower()
        return any(t in kind for t in ("v2", "v3", "v4", "v5"))
    except Exception:
        return False


def _probe_lane_concat():
    """Verify in-kernel lane-axis concat lowers on this chip; else fall back."""
    try:
        def k(a_ref, b_ref, o_ref):
            o_ref[...] = jnp.concatenate([a_ref[...], b_ref[...]], axis=-1)
        a = jnp.zeros((8, 128), jnp.bfloat16)
        out = pl.pallas_call(
            k, out_shape=jax.ShapeDtypeStruct((8, 256), jnp.bfloat16))(a, a)
        jax.block_until_ready(out)
        return True
    except Exception:
        return False


_MERGE_K = (not _small_mxu_device()) and _probe_lane_concat()


def _group_dims(in_dims, merge):
    """Group consecutive 128-wide W1 pieces (runs of >=2) into one K>=256 dot."""
    groups, i, n = [], 0, len(in_dims)
    while i < n:
        if merge and in_dims[i] == 128:
            j = i
            while j < n and in_dims[j] == 128:
                j += 1
            if j - i >= 2:
                groups.append(list(range(i, j)))
                i = j
                continue
        groups.append([i])
        i += 1
    return groups


# ----------------------------------------------------------------------------
# Pallas kernels
# ----------------------------------------------------------------------------
def _mlp2_kernel(*refs, activation, group_sizes):
    """out = act(sum_g concat(x_g) @ W1_g + b1) @ W2 + b2.

    Streamed bf16 row tiles, resident bf16 weights, f32 accumulation, bf16 (or
    f32) final store. `group_sizes[g] > 1` -> the group's input tiles are
    concatenated in VMEM so the first matmul runs a K>=256 MXU dot.
    """
    n_inputs = sum(group_sizes)
    n_groups = len(group_sizes)
    xs = refs[:n_inputs]
    w1s = refs[n_inputs:n_inputs + n_groups]
    b1_ref, w2_ref, b2_ref, o_ref = refs[n_inputs + n_groups:]

    acc = None
    xi = 0
    for gsz, w_ref in zip(group_sizes, w1s):
        if gsz == 1:
            xg = xs[xi][...]
        else:
            # VMEM-only concat of lane-aligned bf16 tiles (no HBM round trip).
            xg = jnp.concatenate([xs[xi + j][...] for j in range(gsz)], axis=-1)
        xi += gsz
        d = jnp.dot(xg, w_ref[...], preferred_element_type=jnp.float32)
        acc = d if acc is None else acc + d

    h = acc + b1_ref[...]
    if activation == "relu":
        h = jnp.maximum(h, 0.0)
    else:  # elu
        h = jnp.where(h > 0.0, h, jnp.expm1(jnp.minimum(h, 0.0)))
    o_ref[...] = (jnp.dot(h.astype(jnp.bfloat16), w2_ref[...],
                          preferred_element_type=jnp.float32)
                  + b2_ref[...]).astype(o_ref.dtype)


def fused_mlp(xs, p, activation, out_dtype=jnp.bfloat16, tm_cap=1024):
    """Row-tiled two-layer MLP over the concatenation of `xs` (concat fused)."""
    m = xs[0].shape[0]
    xs = [x.astype(jnp.bfloat16) for x in xs]          # stream bf16, not f32
    tm = min(tm_cap, _round_up(m, 8))
    mp = _round_up(m, tm)
    xs_p = [_pad_rows(x, mp) for x in xs]

    w1s = list(p["w1"])
    b1, w2, b2 = p["b1"], p["w2"], p["b2"]
    out_dim = w2.shape[1]
    kern = partial(_mlp2_kernel, activation=activation,
                   group_sizes=tuple(p["gsizes"]))

    in_specs = ([pl.BlockSpec((tm, x.shape[1]), lambda i: (i, 0)) for x in xs_p]
                + [pl.BlockSpec(w.shape, lambda i: (0, 0)) for w in w1s]
                + [pl.BlockSpec(b1.shape, lambda i: (0, 0)),
                   pl.BlockSpec(w2.shape, lambda i: (0, 0)),
                   pl.BlockSpec(b2.shape, lambda i: (0, 0))])

    out = pl.pallas_call(
        kern,
        out_shape=jax.ShapeDtypeStruct((mp, out_dim), out_dtype),
        grid=(mp // tm,),
        in_specs=in_specs,
        out_specs=pl.BlockSpec((tm, out_dim), lambda i: (i, 0)),
        compiler_params=pltpu.CompilerParams(dimension_semantics=("parallel",)),
    )(*xs_p, *w1s, b1, w2, b2)
    return out[:m] if mp != m else out


def _segmean_kernel(seg_ref, vals_ref, o_ref, acc_ref, cnt_ref, *, ts):
    """Tiled segment-mean: bf16 one-hot matmul into an f32 scratch accumulator,
    in-kernel segment counts, approx-reciprocal mean finalize on the last tile."""
    t = pl.program_id(1)

    @pl.when(t == 0)
    def _():
        acc_ref[...] = jnp.zeros_like(acc_ref)
        cnt_ref[...] = jnp.zeros_like(cnt_ref)

    base = pl.program_id(0) * ts
    local = seg_ref[...] - base                                   # (1, tm) int32
    iota = jax.lax.broadcasted_iota(jnp.int32, (ts, local.shape[1]), 0)
    onehot = (local == iota).astype(jnp.bfloat16)                 # exact in bf16
    acc_ref[...] += jnp.dot(onehot, vals_ref[...],
                            preferred_element_type=jnp.float32)
    cnt_ref[...] += jnp.sum(onehot.astype(jnp.float32), axis=1, keepdims=True)

    @pl.when(t == pl.num_programs(1) - 1)
    def _():
        inv = pl.reciprocal(jnp.maximum(cnt_ref[...], 1.0), approx=True)
        o_ref[...] = (acc_ref[...] * inv).astype(o_ref.dtype)


def segment_mean(vals, seg_ids, num_segments):
    """scatter_mean(vals, seg_ids) -> [num_segments, F] (empty segments -> 0)."""
    m, f = vals.shape
    vals = vals.astype(jnp.bfloat16)
    tm = min(512, _round_up(m, 128))
    mp = _round_up(m, tm)
    ts = min(512, _round_up(num_segments, 8))
    sp = _round_up(num_segments, ts)

    vals_p = _pad_rows(vals, mp)
    seg_ids = seg_ids.astype(jnp.int32)
    # pad value sp is out of range for every segment tile -> contributes nothing
    seg_p = jnp.full((1, mp), sp, dtype=jnp.int32).at[0, :m].set(seg_ids)

    out = pl.pallas_call(
        partial(_segmean_kernel, ts=ts),
        out_shape=jax.ShapeDtypeStruct((sp, f), jnp.bfloat16),
        grid=(sp // ts, mp // tm),
        in_specs=[
            pl.BlockSpec((1, tm), lambda s, t: (0, t)),
            pl.BlockSpec((tm, f), lambda s, t: (t, 0)),
        ],
        out_specs=pl.BlockSpec((ts, f), lambda s, t: (s, 0)),
        scratch_shapes=[pltpu.VMEM((ts, f), jnp.float32),
                        pltpu.VMEM((ts, 1), jnp.float32)],
        compiler_params=pltpu.CompilerParams(
            dimension_semantics=("parallel", "arbitrary")),
    )(seg_p, vals_p)
    return out[:num_segments]


def _bn_stats_kernel(x_ref, sum_ref, sq_ref):
    @pl.when(pl.program_id(0) == 0)
    def _():
        sum_ref[...] = jnp.zeros_like(sum_ref)
        sq_ref[...] = jnp.zeros_like(sq_ref)
    x = x_ref[...]
    sum_ref[...] += jnp.sum(x, axis=0, keepdims=True)
    sq_ref[...] += jnp.sum(x * x, axis=0, keepdims=True)


def _affine_kernel(x_ref, scale_ref, shift_ref, o_ref):
    o_ref[...] = (x_ref[...] * scale_ref[...] + shift_ref[...]).astype(o_ref.dtype)


def batch_norm(x, gamma, beta, eps=1e-5):
    """gnn.BatchNorm forward with batch statistics; bf16 normalized output.

    TODO(synk): eval-mode running mean/var (and the running-stat update) are
    not modeled; only the batch-statistics forward is implemented.
    """
    m, d = x.shape
    tm = min(1024, _round_up(m, 8))
    mp = _round_up(m, tm)
    x_p = _pad_rows(x, mp)

    s, sq = pl.pallas_call(
        _bn_stats_kernel,
        out_shape=(jax.ShapeDtypeStruct((1, d), jnp.float32),
                   jax.ShapeDtypeStruct((1, d), jnp.float32)),
        grid=(mp // tm,),
        in_specs=[pl.BlockSpec((tm, d), lambda i: (i, 0))],
        out_specs=(pl.BlockSpec((1, d), lambda i: (0, 0)),
                   pl.BlockSpec((1, d), lambda i: (0, 0))),
        compiler_params=pltpu.CompilerParams(dimension_semantics=("arbitrary",)),
    )(x_p)

    mean = s / m
    var = jnp.maximum(sq / m - mean * mean, 0.0)      # biased var, like BN forward
    scale = gamma * jax.lax.rsqrt(var + eps)
    shift = beta - mean * scale

    out = pl.pallas_call(
        _affine_kernel,
        out_shape=jax.ShapeDtypeStruct((mp, d), jnp.bfloat16),
        grid=(mp // tm,),
        in_specs=[pl.BlockSpec((tm, d), lambda i: (i, 0)),
                  pl.BlockSpec((1, d), lambda i: (0, 0)),
                  pl.BlockSpec((1, d), lambda i: (0, 0))],
        out_specs=pl.BlockSpec((tm, d), lambda i: (i, 0)),
        compiler_params=pltpu.CompilerParams(dimension_semantics=("parallel",)),
    )(x_p, scale, shift)
    return out[:m]


# ----------------------------------------------------------------------------
# Parameters (deterministic synthetic init; PyTorch Linear-style uniform bounds)
# ----------------------------------------------------------------------------
def mlp_params(key, in_dims, dhid, dout, out_pad=None):
    """Two-layer MLP params; W1 split row-wise per input piece (consecutive
    128-wide pieces merged into one group on 256-wide-MXU chips), bf16 weights."""
    k1, k2, k3, k4 = jax.random.split(key, 4)
    din = sum(in_dims)
    bound1 = 1.0 / math.sqrt(din)
    w1 = jax.random.uniform(k1, (din, dhid), jnp.float32, -bound1, bound1)
    b1 = jax.random.uniform(k2, (1, dhid), jnp.float32, -bound1, bound1)
    bound2 = 1.0 / math.sqrt(dhid)
    w2 = jax.random.uniform(k3, (dhid, dout), jnp.float32, -bound2, bound2)
    b2 = jax.random.uniform(k4, (1, dout), jnp.float32, -bound2, bound2)
    if out_pad is not None and out_pad != dout:
        w2 = jnp.pad(w2, ((0, 0), (0, out_pad - dout)))
        b2 = jnp.pad(b2, ((0, 0), (0, out_pad - dout)))

    groups = _group_dims(list(in_dims), _MERGE_K)
    offsets = [0]
    for d in in_dims:
        offsets.append(offsets[-1] + d)
    pieces, gsizes = [], []
    for grp in groups:
        lo, hi = offsets[grp[0]], offsets[grp[-1] + 1]
        pieces.append(w1[lo:hi].astype(jnp.bfloat16))
        gsizes.append(len(grp))
    return {"w1": tuple(pieces), "gsizes": tuple(gsizes), "b1": b1,
            "w2": w2.astype(jnp.bfloat16), "b2": b2}


def init_params(key, dn, de, dg, out_channels):
    keys = jax.random.split(key, 32)
    ki = iter(keys)
    p = {
        "node_bn": (jnp.ones((1, dn), jnp.float32), jnp.zeros((1, dn), jnp.float32)),
        "edge_bn": (jnp.ones((1, de), jnp.float32), jnp.zeros((1, de), jnp.float32)),
    }

    def meta(node_in, edge_in, edge_out, node_out, glob_in, glob_out):
        return {
            "edge":   mlp_params(next(ki), [node_in, node_in, edge_in], edge_out, edge_out),
            "node1":  mlp_params(next(ki), [node_in, edge_out], node_out, node_out),
            "node2":  mlp_params(next(ki), [node_in, node_out], node_out, node_out),
            "global": mlp_params(next(ki), [glob_in, node_out], glob_out, glob_out),
        }

    p["meta1"] = meta(dn, de, 512, 128, dg, 128)
    p["meta2"] = meta(128, 512, 512, 128, 128, 128)
    p["meta3"] = meta(128, 512, 512, 128, 128, 128)
    p["meta4"] = meta(128, 512, 512, 128, 128, 128)
    p["meta5"] = meta(128, 512, 512, 128, 128, 128)
    p["meta6"] = meta(128, 512, 128, 128, 128, 256)
    # head: lin1(256->512), ELU, lin2(512->out); out padded to a 128 multiple
    out_pad = _round_up(out_channels, 128)
    p["head"] = mlp_params(next(ki), [256], 512, out_channels, out_pad=out_pad)
    p["out_channels"] = out_channels
    return p


# ----------------------------------------------------------------------------
# Model forward (JAX glue around Pallas kernels)
# ----------------------------------------------------------------------------
def edge_model(p, x, edge_index, e):
    # TODO(synk): x[row]/x[col] gathers stay as bf16 jnp.take glue; an in-kernel
    # scalar-prefetch gather would remove the intermediate HBM copies entirely.
    row, col = edge_index[0], edge_index[1]
    src = jnp.take(x, row, axis=0)
    dst = jnp.take(x, col, axis=0)
    return fused_mlp([src, dst, e], p, "relu")


def node_model(p1, p2, x, edge_index, e):
    row, col = edge_index[0], edge_index[1]
    src = jnp.take(x, row, axis=0)
    h = fused_mlp([src, e], p1, "relu")
    agg = segment_mean(h, col, x.shape[0])
    return fused_mlp([x, agg], p2, "relu")


def global_model(p, x, g, batch):
    node_mean = segment_mean(x, batch, g.shape[0])
    return fused_mlp([g, node_mean], p, "relu")


def meta_layer(p, x, edge_index, e, g, batch):
    e = edge_model(p["edge"], x, edge_index, e)
    x = node_model(p["node1"], p["node2"], x, edge_index, e)
    g = global_model(p["global"], x, g, batch)
    return x, e, g


def gnn_forward(params, x, edge_index, e, g, batch):
    x = batch_norm(x, *params["node_bn"])
    e = batch_norm(e, *params["edge_bn"])
    for name in ("meta1", "meta2", "meta3", "meta4", "meta5", "meta6"):
        x, e, g = meta_layer(params[name], x, edge_index, e, g, batch)
        # TODO(synk): F.dropout(x, 0.1) is train-mode stochastic dropout in the
        # reference; applied as identity here (deterministic inference).
    hp = params["head"]
    logits_p = fused_mlp([g], hp, "elu", out_dtype=jnp.float32)
    return g.astype(jnp.float32), logits_p[:, :params["out_channels"]]


# ----------------------------------------------------------------------------
if __name__ == "__main__":
    DN, DE, DG, OUT = 16, 8, 32, 64          # node / edge / global feats, out_channels
    N, E, B = 16, 32, 2                      # nodes, edges, graphs

    key = jax.random.PRNGKey(0)
    kx, ke, kg, kei, kp = jax.random.split(key, 5)

    x = jax.random.normal(kx, (N, DN), jnp.float32)
    e = jax.random.normal(ke, (E, DE), jnp.float32)
    g = jax.random.normal(kg, (B, DG), jnp.float32)
    batch = jnp.repeat(jnp.arange(B, dtype=jnp.int32), N // B)      # [N]

    # edges kept within each graph (half the edges per graph)
    half = jax.random.randint(kei, (2, E // 2), 0, N // B, dtype=jnp.int32)
    edge_index = jnp.concatenate([half, half + N // B], axis=1)     # [2, E]

    params = init_params(kp, DN, DE, DG, OUT)

    g_out, logits = gnn_forward(params, x, edge_index, e, g, batch)
    jax.block_until_ready((g_out, logits))

    assert g_out.shape == (B, 256) and g_out.dtype == jnp.float32
    assert logits.shape == (B, OUT) and logits.dtype == jnp.float32
    assert bool(jnp.all(jnp.isfinite(g_out))) and bool(jnp.all(jnp.isfinite(logits)))
    print("KERNEL_OK")
</pallas_src>

<mosaic_0001>
module attributes {stable_mosaic.version = 11 : i64} {
  func.func @k(%arg0: memref<8x128xbf16, #tpu.memory_space<vmem>>, %arg1: memref<8x128xbf16, #tpu.memory_space<vmem>>, %arg2: memref<8x256xbf16, #tpu.memory_space<vmem>>) attributes {dimension_semantics = [], scalar_prefetch = 0 : i64, scratch_operands = 0 : i64, tpu.core_type = #tpu.core_type<tc>} {
    %c0 = arith.constant 0 : index
    %c0_0 = arith.constant 0 : index
    %0 = vector.load %arg0[%c0, %c0_0] : memref<8x128xbf16, #tpu.memory_space<vmem>>, vector<8x128xbf16>
    %c0_1 = arith.constant 0 : index
    %c0_2 = arith.constant 0 : index
    %1 = vector.load %arg1[%c0_1, %c0_2] : memref<8x128xbf16, #tpu.memory_space<vmem>>, vector<8x128xbf16>
    %2 = tpu.concatenate %0, %1 in 1 : vector<8x128xbf16>, vector<8x128xbf16> -> vector<8x256xbf16>
    %c0_3 = arith.constant 0 : index
    %c0_4 = arith.constant 0 : index
    %3 = vector.load %arg2[%c0_3, %c0_4] : memref<8x256xbf16, #tpu.memory_space<vmem>>, vector<8x256xbf16>
    tpu.vector_store %arg2[%c0_3, %c0_4], %2 {strides = array<i32>} : memref<8x256xbf16, #tpu.memory_space<vmem>>, vector<8x256xbf16>,
    return
  }
}

module attributes {stable_mosaic.version = 11 : i64} {
  func.func @_bn_stats_kernel(%arg0: i32, %arg1: memref<16x16xf32, #tpu.memory_space<vmem>>, %arg2: memref<1x16xf32, #tpu.memory_space<vmem>>, %arg3: memref<1x16xf32, #tpu.memory_space<vmem>>) attributes {dimension_semantics = [#tpu.dimension_semantics<arbitrary>], iteration_bounds = array<i64: 1>, scalar_prefetch = 0 : i64, scratch_operands = 0 : i64, tpu.core_type = #tpu.core_type<tc>, window_params = [{transform_indices = @transform_0, window_bounds = array<i64: 16, 16>}, {pipeline_mode = #tpu.pipeline_mode<synchronous>, transform_indices = @transform_1, window_bounds = array<i64: 1, 16>}, {pipeline_mode = #tpu.pipeline_mode<synchronous>, transform_indices = @transform_2, window_bounds = array<i64: 1, 16>}]} {
    %c0_i32 = arith.constant 0 : i32
    %0 = arith.cmpi eq, %arg0, %c0_i32 : i32
    %1 = arith.extui %0 : i1 to i32
    %c0_i32_0 = arith.constant 0 : i32
    %2 = arith.cmpi ne, %1, %c0_i32_0 : i32
    scf.if %2 {
      %cst_11 = arith.constant 0.000000e+00 : f32
      %15 = vector.broadcast %cst_11 : f32 to vector<1x16xf32>
      %c0_12 = arith.constant 0 : index
      %c0_13 = arith.constant 0 : index
      %16 = vector.load %arg2[%c0_12, %c0_13] : memref<1x16xf32, #tpu.memory_space<vmem>>, vector<1x16xf32>
      tpu.vector_store %arg2[%c0_12, %c0_13], %15 {strides = array<i32>} : memref<1x16xf32, #tpu.memory_space<vmem>>, vector<1x16xf32>,
      %cst_14 = arith.constant 0.000000e+00 : f32
      %17 = vector.broadcast %cst_14 : f32 to vector<1x16xf32>
      %c0_15 = arith.constant 0 : index
      %c0_16 = arith.constant 0 : index
      %18 = vector.load %arg3[%c0_15, %c0_16] : memref<1x16xf32, #tpu.memory_space<vmem>>, vector<1x16xf32>
      tpu.vector_store %arg3[%c0_15, %c0_16], %17 {strides = array<i32>} : memref<1x16xf32, #tpu.memory_space<vmem>>, vector<1x16xf32>,
    } else {
    }
    %c0 = arith.constant 0 : index
    %c0_1 = arith.constant 0 : index
    %3 = vector.load %arg1[%c0, %c0_1] : memref<16x16xf32, #tpu.memory_space<vmem>>, vector<16x16xf32>
    %c0_2 = arith.constant 0 : index
    %c0_3 = arith.constant 0 : index
    %4 = vector.load %arg2[%c0_2, %c0_3] : memref<1x16xf32, #tpu.memory_space<vmem>>, vector<1x16xf32>
    %cst = arith.constant dense<0.000000e+00> : vector<16xf32>
    %5 = vector.multi_reduction <add>, %3, %cst [0] : vector<16x16xf32> to vector<16xf32>
    %6 = vector.shape_cast %5 : vector<16xf32> to vector<1x16xf32>
    %7 = arith.addf %4, %6 : vector<1x16xf32>
    %c0_4 = arith.constant 0 : index
    %c0_5 = arith.constant 0 : index
    %8 = vector.load %arg2[%c0_4, %c0_5] : memref<1x16xf32, #tpu.memory_space<vmem>>, vector<1x16xf32>
    tpu.vector_store %arg2[%c0_4, %c0_5], %7 {strides = array<i32>} : memref<1x16xf32, #tpu.memory_space<vmem>>, vector<1x16xf32>,
    %c0_6 = arith.constant 0 : index
    %c0_7 = arith.constant 0 : index
    %9 = vector.load %arg3[%c0_6, %c0_7] : memref<1x16xf32, #tpu.memory_space<vmem>>, vector<1x16xf32>
    %10 = arith.mulf %3, %3 : vector<16x16xf32>
    %cst_8 = arith.constant dense<0.000000e+00> : vector<16xf32>
    %11 = vector.multi_reduction <add>, %10, %cst_8 [0] : vector<16x16xf32> to vector<16xf32>
    %12 = vector.shape_cast %11 : vector<16xf32> to vector<1x16xf32>
    %13 = arith.addf %9, %12 : vector<1x16xf32>
    %c0_9 = arith.constant 0 : index
    %c0_10 = arith.constant 0 : index
    %14 = vector.load %arg3[%c0_9, %c0_10] : memref<1x16xf32, #tpu.memory_space<vmem>>, vector<1x16xf32>
    tpu.vector_store %arg3[%c0_9, %c0_10], %13 {strides = array<i32>} : memref<1x16xf32, #tpu.memory_space<vmem>>, vector<1x16xf32>,
    return
  }
  func.func @transform_0(%arg0: i32) -> (i32, i32) {
    %c0_i32 = arith.constant 0 : i32
    %c0_i32_0 = arith.constant 0 : i32
    return %arg0, %c0_i32 : i32, i32
  }
  func.func @transform_1(%arg0: i32) -> (i32, i32) {
    %c0_i32 = arith.constant 0 : i32
    %c0_i32_0 = arith.constant 0 : i32
    %c0_i32_1 = arith.constant 0 : i32
    return %c0_i32, %c0_i32_0 : i32, i32
  }
  func.func @transform_2(%arg0: i32) -> (i32, i32) {
    %c0_i32 = arith.constant 0 : i32
    %c0_i32_0 = arith.constant 0 : i32
    %c0_i32_1 = arith.constant 0 : i32
    return %c0_i32, %c0_i32_0 : i32, i32
  }
}

</mosaic_0001>

<llo_original>
// kernel: tpu_custom_call.1
$region0: #{tpu_custom_call.1}
  #allocation0 [shape = 'u32[]', space=smem, size = 0x4, offset = 0x4, fixed_abs, tag = 'smem constant byte address 0x4 - core index']
  #allocation1 [shape = 'u32[72,128]{1,0:T(1,128)}', space=vmem, size = 0x9000, scoped, tag = 'internal scratch']
  %s0 = inlined_call_operand.hbm [shape: bf16[8,128], index: 0, kind: input, shape index: {}]
  %s1 = inlined_call_operand.hbm [shape: bf16[8,128], index: 1, kind: input, shape index: {}]
  %s2 = inlined_call_operand.hbm [shape: bf16[8,256], index: 2, kind: output, shape index: {}]
  %s3 = sld [smem:[#allocation0]]
  $region26: #{tpu_custom_call.1} parent=0
    _
  %s5 = ssub.s32 1, %s3
  %s6 = scalar_select 0, %s5, %s3
  $region1: #{tpu_custom_call.1} parent=0
    #allocation2 [shape = 'u8[2048]{0}', space=vmem, size = 0x800, scoped, tag = 'input window, operand 0, single buffered']
    #allocation3 [shape = 's32[1]{0}', space=sflag, size = 0x4, scoped, tag = 'scoped memory for tpu_custom_call.1']
    #allocation4 [shape = 's32[1]{0}', space=sflag, size = 0x4, scoped, tag = 'scoped memory for tpu_custom_call.1']
    #allocation5 [shape = 'u8[2048]{0}', space=vmem, size = 0x800, scoped, tag = 'input window, operand 1, single buffered']
    #allocation6 [shape = 's32[1]{0}', space=sflag, size = 0x4, scoped, tag = 'scoped memory for tpu_custom_call.1']
    #allocation7 [shape = 'u8[4096]{0}', space=vmem, size = 0x1000, scoped, tag = 'output window, operand 0, single buffered']
    %7 = vsyncpa [#allocation3], 0
    %8 = vsyncpa [#allocation6], 0
    %9 = vsyncpa [#allocation4], 0
    // Predicated region
    $region2: #{tpu_custom_call.1} parent=1 // pred_check
      _
    $region3: #{tpu_custom_call.1} parent=1 // pred_check_branch
      %11 = sbr.rel (0) target = $region5
    $region4: #{tpu_custom_call.1} parent=1 // pred_region
      %13 = vsyncadd [#allocation3], 0
      %s15 = sshll.u32 %s0, 4
      %s16 = int_to_ptr.hbm [resolvable:$true] %s15
      %s17 = sshll.u32 [#allocation2], 4
      %s18 = int_to_ptr.vmem [resolvable:$true] %s17
      %20 = dma.hbm_to_vmem [thread:$0]  %s16, 64, %s18, [#allocation3]
    $region5: #{tpu_custom_call.1} parent=1 // pred_fallthru
      _
    // Predicated region
    $region6: #{tpu_custom_call.1} parent=1 // pred_check
      _
    $region7: #{tpu_custom_call.1} parent=1 // pred_check_branch
      %22 = sbr.rel (0) target = $region9
    $region8: #{tpu_custom_call.1} parent=1 // pred_region
      %24 = vsyncadd [#allocation6], 0
      %s26 = sshll.u32 %s1, 4
      %s27 = int_to_ptr.hbm [resolvable:$true] %s26
      %s28 = sshll.u32 [#allocation5], 4
      %s29 = int_to_ptr.vmem [resolvable:$true] %s28
      %31 = dma.hbm_to_vmem [thread:$0]  %s27, 64, %s29, [#allocation6]
    $region9: #{tpu_custom_call.1} parent=1 // pred_fallthru
      _
    // Predicated region
    $region10: #{tpu_custom_call.1} parent=1 // pred_check
      _
    $region11: #{tpu_custom_call.1} parent=1 // pred_check_branch
      %33 = sbr.rel (0) target = $region13
    $region12: #{tpu_custom_call.1} parent=1 // pred_region
      %35 = dma.done [#allocation3], 64
    $region13: #{tpu_custom_call.1} parent=1 // pred_fallthru
      _
    // Predicated region
    $region14: #{tpu_custom_call.1} parent=1 // pred_check
      _
    $region15: #{tpu_custom_call.1} parent=1 // pred_check_branch
      %37 = sbr.rel (0) target = $region17
    $region16: #{tpu_custom_call.1} parent=1 // pred_region
      %39 = dma.done [#allocation6], 64
    $region17: #{tpu_custom_call.1} parent=1 // pred_fallthru
      _
    %v40 = vld [vmem:[#allocation2] sm:$0xf]
    %v41 = vld [vmem:[#allocation5] sm:$0xf]
    %v44 = vunpack.c.l.b16 %v40
    %v45 = vunpack.c.l.b16 %v41
    %v46 = vpack.c.b16 %v45, %v44
    %48 = vst [vmem:[#allocation7] sm:$0xff] %v46
    // Predicated region
    $region18: #{tpu_custom_call.1} parent=1 // pred_check
      _
    $region19: #{tpu_custom_call.1} parent=1 // pred_check_branch
      %50 = sbr.rel (0) target = $region21
    $region20: #{tpu_custom_call.1} parent=1 // pred_region
      %52 = vsyncadd [#allocation4], 0
      %s54 = sshll.u32 [#allocation7], 4
      %s55 = int_to_ptr.vmem [resolvable:$true] %s54
      %s56 = sshll.u32 %s2, 4
      %s57 = int_to_ptr.hbm [resolvable:$true] %s56
      %59 = dma.vmem_to_hbm [thread:$0]  %s55, 128, %s57, [#allocation4]
    $region21: #{tpu_custom_call.1} parent=1 // pred_fallthru
      _
    // Predicated region
    $region22: #{tpu_custom_call.1} parent=1 // pred_check
      _
    $region23: #{tpu_custom_call.1} parent=1 // pred_check_branch
      %61 = sbr.rel (0) target = $region25
    $region24: #{tpu_custom_call.1} parent=1 // pred_region
      %63 = dma.done [#allocation4], 128
    $region25: #{tpu_custom_call.1} parent=1 // pred_fallthru
      _
    %64 = vsyncpa [#allocation3], 1
    %65 = vsyncpa [#allocation6], 1
    %66 = vsyncpa [#allocation4], 1

// kernel: tpu_custom_call.1
$region0: #{tpu_custom_call.1}
  #allocation0 [shape = 'u32[]', space=smem, size = 0x4, offset = 0x4, fixed_abs, tag = 'smem constant byte address 0x4 - core index']
  #allocation1 [shape = 'u32[72,128]{1,0:T(1,128)}', space=vmem, size = 0x9000, scoped, tag = 'internal scratch']
  %s0 = inlined_call_operand.hbm [shape: f32[16,16], index: 0, kind: input, shape index: {}]
  %s1 = inlined_call_operand.hbm [shape: f32[1,16], index: 1, kind: output, shape index: {0}]
  %s2 = inlined_call_operand.hbm [shape: f32[1,16], index: 2, kind: output, shape index: {1}]
  %3 = xla_tuple %s1, %s2
  %s4 = sld [smem:[#allocation0]]
  $region30: #{tpu_custom_call.1} parent=0
    _
  %s6 = ssub.s32 1, %s4
  %s7 = scalar_select 0, %s6, %s4
  $region1: #{tpu_custom_call.1} parent=0
    #allocation2 [shape = 'u8[8192]{0}', space=vmem, size = 0x2000, scoped, tag = 'input window, operand 0, single buffered']
    #allocation3 [shape = 's32[1]{0}', space=sflag, size = 0x4, scoped, tag = 'scoped memory for tpu_custom_call.1']
    #allocation4 [shape = 's32[1]{0}', space=sflag, size = 0x4, scoped, tag = 'scoped memory for tpu_custom_call.1']
    #allocation5 [shape = 'u8[512]{0}', space=vmem, size = 0x400, scoped, tag = 'output window, operand 0, single buffered']
    #allocation6 [shape = 'u8[512]{0}', space=vmem, size = 0x400, scoped, tag = 'output window, operand 1, single buffered']
    #allocation7 [shape = 's32[1]{0}', space=sflag, size = 0x4, scoped, tag = 'scoped memory for tpu_custom_call.1']
    %8 = vsyncpa [#allocation3], 0
    %9 = vsyncpa [#allocation4], 0
    %10 = vsyncpa [#allocation7], 0
    // Predicated region
    $region2: #{tpu_custom_call.1} parent=1 // pred_check
      _
    $region3: #{tpu_custom_call.1} parent=1 // pred_check_branch
      %12 = sbr.rel (0) target = $region5
    $region4: #{tpu_custom_call.1} parent=1 // pred_region
      %14 = vsyncadd [#allocation3], 0
      %s15 = sshll.u32 %s0, 4
      %s16 = int_to_ptr.hbm [resolvable:$true] %s15
      %s17 = sshll.u32 [#allocation2], 4
      %s18 = int_to_ptr.vmem [resolvable:$true] %s17
      %23 = dma.hbm_to_vmem [thread:$0]  %s16, 256, %s18, [#allocation3], 128, 128, 8
    $region5: #{tpu_custom_call.1} parent=1 // pred_fallthru
      _
    // Predicated region
    $region6: #{tpu_custom_call.1} parent=1 // pred_check
      _
    $region7: #{tpu_custom_call.1} parent=1 // pred_check_branch
      %25 = sbr.rel (0) target = $region9
    $region8: #{tpu_custom_call.1} parent=1 // pred_region
      %27 = dma.done [#allocation3], 256
    $region9: #{tpu_custom_call.1} parent=1 // pred_fallthru
      _
    %p28 = scmp.eq.s32.totalorder 0, 0
    // Predicated region
    $region10: #{tpu_custom_call.1} parent=1 // pred_check
      %p29 = pneg %p28
    $region11: #{tpu_custom_call.1} parent=1 // pred_check_branch
      %31 = sbr.rel (%p29) target = $region13
    $region12: #{tpu_custom_call.1} parent=1 // pred_region
      %vm32 = vcmask 122880
      %33 = vst.msk [vmem:[#allocation5] sm:$0x1] %vm32, 0.0
      %34 = vst.msk [vmem:[#allocation6] sm:$0x1] %vm32, 0.0
    $region13: #{tpu_custom_call.1} parent=1 // pred_fallthru
      _
    %v35 = vld [vmem:[#allocation2] sm:$0xff]
    %v36 = vld [vmem:[#allocation2 + $0x8] sm:$0xff]
    %v37 = vld [vmem:[#allocation5] sm:$0x1]
    %vm38 = vcmask 130048
    %v39 = vsel %vm38, %v35, 0.0
    %v40 = vsel %vm38, %v36, 0.0
    %v41 = vadd.f32 %v39, %v40
    %v42 = vrot.slane %v41, 4
    %v43 = vadd.f32 %v41, %v42
    %v44 = vrot.slane %v43, 2
    %v45 = vadd.f32 %v43, %v44
    %v46 = vrot.slane %v45, 1
    %v47 = vadd.f32 %v45, %v46
    %v48 = vadd.f32 %v37, %v47
    %vm49 = vcmask 122880
    %50 = vst.msk [vmem:[#allocation5] sm:$0x1] %vm49, %v48
    %v51 = vld [vmem:[#allocation6] sm:$0x1]
    %v52 = vmul.f32 %v35, %v35
    %v53 = vmul.f32 %v36, %v36
    %v54 = vsel %vm38, %v52, 0.0
    %v55 = vsel %vm38, %v53, 0.0
    %v56 = vadd.f32 %v54, %v55
    %v57 = vrot.slane %v56, 4
    %v58 = vadd.f32 %v56, %v57
    %v59 = vrot.slane %v58, 2
    %v60 = vadd.f32 %v58, %v59
    %v61 = vrot.slane %v60, 1
    %v62 = vadd.f32 %v60, %v61
    %v63 = vadd.f32 %v51, %v62
    %64 = vst.msk [vmem:[#allocation6] sm:$0x1] %vm49, %v63
    // Predicated region
    $region14: #{tpu_custom_call.1} parent=1 // pred_check
      _
    $region15: #{tpu_custom_call.1} parent=1 // pred_check_branch
      %66 = sbr.rel (0) target = $region17
    $region16: #{tpu_custom_call.1} parent=1 // pred_region
      %68 = vsyncadd [#allocation4], 0
      %s70 = sshll.u32 [#allocation5], 4
      %s71 = int_to_ptr.vmem [resolvable:$true] %s70
      %s72 = sshll.u32 %s1, 4
      %s73 = int_to_ptr.hbm [resolvable:$true] %s72
      %75 = dma.vmem_to_hbm [thread:$0]  %s71, 16, %s73, [#allocation4]
    $region17: #{tpu_custom_call.1} parent=1 // pred_fallthru
      _
    // Predicated region
    $region18: #{tpu_custom_call.1} parent=1 // pred_check
      _
    $region19: #{tpu_custom_call.1} parent=1 // pred_check_branch
      %77 = sbr.rel (0) target = $region21
    $region20: #{tpu_custom_call.1} parent=1 // pred_region
      %79 = vsyncadd [#allocation7], 0
      %s81 = sshll.u32 [#allocation6], 4
      %s82 = int_to_ptr.vmem [resolvable:$true] %s81
      %s83 = sshll.u32 %s2, 4
      %s84 = int_to_ptr.hbm [resolvable:$true] %s83
      %86 = dma.vmem_to_hbm [thread:$0]  %s82, 16, %s84, [#allocation7]
    $region21: #{tpu_custom_call.1} parent=1 // pred_fallthru
      _
    // Predicated region
    $region22: #{tpu_custom_call.1} parent=1 // pred_check
      _
    $region23: #{tpu_custom_call.1} parent=1 // pred_check_branch
      %88 = sbr.rel (0) target = $region25
    $region24: #{tpu_custom_call.1} parent=1 // pred_region
      %90 = dma.done [#allocation4], 16
    $region25: #{tpu_custom_call.1} parent=1 // pred_fallthru
      _
    // Predicated region
    $region26: #{tpu_custom_call.1} parent=1 // pred_check
      _
    $region27: #{tpu_custom_call.1} parent=1 // pred_check_branch
      %92 = sbr.rel (0) target = $region29
    $region28: #{tpu_custom_call.1} parent=1 // pred_region
      %94 = dma.done [#allocation7], 16
    $region29: #{tpu_custom_call.1} parent=1 // pred_fallthru
      _
    %95 = vsyncpa [#allocation3], 1
    %96 = vsyncpa [#allocation4], 1
    %97 = vsyncpa [#allocation7], 1

</llo_original>
